<compile_context>
chip_gen: v5e
topology: v5e:2x2
jax: 0.10.0
libtpu: 0.0.40
codegen_flags: <defaults>
</compile_context>

<pallas_src>
import jax
import jax.numpy as jnp
from jax.experimental import pallas as pl
from jax.experimental.pallas import tpu as pltpu


BN_EPS = 1e-5
_MAX_TILE_B = 2048                     # upper bound for the batch-tile sweep
_FAST_PATH_BYTES = 4 * 1024 * 1024     # whole-problem-in-VMEM threshold for the no-grid path


def _round_up(x, m):
    return pl.cdiv(x, m) * m


def _feat_bottleneck_kernel(x_ref, w_ref, b_ref, o_ref):
    # Linear with folded BN scale: (TB, F) @ (F, D) -> (TB, D), f32 accumulation on MXU.
    y = jnp.dot(x_ref[...], w_ref[...], preferred_element_type=jnp.float32)
    y = y + b_ref[...]                                   # folded bias, (1, D) f32 broadcast
    # ReLU; Dropout(p=0.3) is identity in eval mode.
    o_ref[...] = jnp.maximum(y, 0.0).astype(o_ref.dtype)


def _vmem_limits():
    # Generation-aware scoped-VMEM ceiling: ~75% of physical per-core VMEM, i.e.
    # ~96 MiB on v5e/v6e (128 MiB) and ~48 MiB on v7x (64 MiB per TensorCore).
    try:
        cap = int(pltpu.get_tpu_info().vmem_capacity_bytes)
    except Exception:  # hardware-info query only (not the pallas_call): safe fallback
        cap = 64 * 1024 * 1024
    limit = min((cap * 3) // 4, 96 * 1024 * 1024)
    budget = (limit * 7) // 8          # headroom for Mosaic-internal scratch
    return limit, budget


def _pick_tile_b(B, F, D_pad, in_bytes, out_bytes, sublane, budget):
    """Largest power-of-two batch tile (multiple of `sublane`) fitting the VMEM budget."""
    cap = min(_MAX_TILE_B, _round_up(B, sublane))
    # The constant-index W / bias still get the default two pipeline buffers (Pallas
    # skips the redundant re-fetch DMA, but the allocation is doubled): account for it.
    fixed = 2 * F * D_pad * in_bytes + 2 * 8 * D_pad * 4
    tile = sublane
    t = sublane
    while t <= cap:
        need = fixed + 2 * t * F * in_bytes + 2 * t * D_pad * out_bytes
        if need <= budget:
            tile = t
        t *= 2
    return tile


def feat_bottleneck_forward(x, w_t, b, gamma, beta, running_mean, running_var,
                            *, compute_dtype=jnp.bfloat16, out_dtype=None, tile_b=None):
    """Eval-mode feat_bootleneck.

    x: (B, F).  w_t: (F, D) = Linear.weight.T.  Returns (B, D) in `out_dtype`
    (defaults to `compute_dtype`).
    """
    B, F = x.shape
    D = w_t.shape[1]
    out_dtype = compute_dtype if out_dtype is None else out_dtype

    # ---- fold eval-mode BatchNorm into the Linear (one-time O(F*D) weight prep) ----
    scale = gamma * jax.lax.rsqrt(running_var + BN_EPS)                        # (D,)
    w_fold = (w_t.astype(jnp.float32) * scale[None, :]).astype(compute_dtype)  # (F, D)
    b_fold = ((b - running_mean) * scale + beta).astype(jnp.float32).reshape(1, D)

    # ---- keep the output lane dim a multiple of 128 (unmasked full-lane stores);
    #      one-time weight prep, no-op for D in {128, 256, 512}.
    D_pad = max(_round_up(D, 128), 128)
    if D_pad != D:
        w_fold = jnp.pad(w_fold, ((0, 0), (0, D_pad - D)))
        b_fold = jnp.pad(b_fold, ((0, 0), (0, D_pad - D)))

    x_c = x if x.dtype == jnp.dtype(compute_dtype) else x.astype(compute_dtype)

    in_bytes = jnp.dtype(compute_dtype).itemsize
    out_bytes = jnp.dtype(out_dtype).itemsize
    sublane = 16 if jnp.dtype(compute_dtype) == jnp.dtype(jnp.bfloat16) else 8
    limit, budget = _vmem_limits()

    total_bytes = (B * F * in_bytes + F * D_pad * in_bytes
                   + 8 * D_pad * 4 + B * D_pad * out_bytes)

    # ---- single-block fast path: whole problem resident in VMEM, no grid ----
    if tile_b is None and B <= _MAX_TILE_B and total_bytes <= _FAST_PATH_BYTES:
        out = pl.pallas_call(
            _feat_bottleneck_kernel,
            out_shape=jax.ShapeDtypeStruct((B, D_pad), out_dtype),
            compiler_params=pltpu.CompilerParams(vmem_limit_bytes=limit),
        )(x_c, w_fold, b_fold)
        return out if D_pad == D else out[:, :D]

    # ---- batch-tiled, pipelined grid path ----
    if tile_b is None:
        tile_b = _pick_tile_b(B, F, D_pad, in_bytes, out_bytes, sublane, budget)
        # Keep >= 2 grid steps so a 2-TensorCore chip (v7x) shards the parallel axis.
        if pl.cdiv(B, tile_b) < 2:
            half = _round_up(pl.cdiv(B, 2), sublane)
            if sublane <= half < tile_b:
                tile_b = half
    assert tile_b % sublane == 0, "tile_b must be a multiple of the sublane packing"

    grid_b = pl.cdiv(B, tile_b)   # partial edge block is masked by Pallas; rows are
                                  # independent, so OOB rows never reach HBM.
    out = pl.pallas_call(
        _feat_bottleneck_kernel,
        out_shape=jax.ShapeDtypeStruct((B, D_pad), out_dtype),
        grid_spec=pltpu.PrefetchScalarGridSpec(
            num_scalar_prefetch=0,
            grid=(grid_b,),
            in_specs=[
                pl.BlockSpec((tile_b, F), lambda i: (i, 0)),   # x tile (double-buffered)
                pl.BlockSpec((F, D_pad), lambda i: (0, 0)),    # folded W (constant index)
                pl.BlockSpec((1, D_pad), lambda i: (0, 0)),    # folded bias (constant index)
            ],
            out_specs=pl.BlockSpec((tile_b, D_pad), lambda i: (i, 0)),
        ),
        compiler_params=pltpu.CompilerParams(
            dimension_semantics=("parallel",),
            vmem_limit_bytes=limit,
        ),
    )(x_c, w_fold, b_fold)
    return out if D_pad == D else out[:, :D]


def reference_forward(x, w_t, b, gamma, beta, running_mean, running_var):
    y = x @ w_t + b
    y = (y - running_mean) / jnp.sqrt(running_var + BN_EPS) * gamma + beta
    return jnp.maximum(y, 0.0)                 # dropout is identity in eval mode


if __name__ == "__main__":
    key = jax.random.PRNGKey(0)
    kx, kw, kg, kb, km, kv, kx2 = jax.random.split(key, 7)

    # Small shapes consistent with the module: feature_dim=64, bottleneck_dim=128.
    B, F, D = 40, 64, 128

    x = jax.random.normal(kx, (B, F), dtype=jnp.float32)

    # Linear init per init_weights: xavier_normal_ on weight (D, F), zeros bias.
    xavier_std = jnp.sqrt(2.0 / (F + D))
    w = jax.random.normal(kw, (D, F), dtype=jnp.float32) * xavier_std
    w_t = w.T                                     # (F, D) so the kernel computes x @ W^T
    b = jnp.zeros((D,), dtype=jnp.float32)

    # BatchNorm1d affine params + non-trivial running stats (exercise the BN fold).
    gamma = 1.0 + 0.05 * jax.random.normal(kg, (D,), dtype=jnp.float32)
    beta = 0.1 * jax.random.normal(kb, (D,), dtype=jnp.float32)
    running_mean = 0.2 * jax.random.normal(km, (D,), dtype=jnp.float32)
    running_var = jax.random.uniform(kv, (D,), dtype=jnp.float32, minval=0.5, maxval=1.5)

    ref = reference_forward(x, w_t, b, gamma, beta, running_mean, running_var)

    # 1) f32 compute / f32 out, single-block fast path (tight tolerance).
    out_f32 = feat_bottleneck_forward(x, w_t, b, gamma, beta, running_mean, running_var,
                                      compute_dtype=jnp.float32)
    out_f32 = jax.block_until_ready(out_f32)
    assert out_f32.shape == (B, D) and out_f32.dtype == jnp.float32
    assert jnp.allclose(out_f32, ref, atol=1e-4, rtol=1e-4), "f32 fast-path mismatch"

    # 2) default path: bf16 compute / bf16 out (loose tolerance).
    out_bf16 = feat_bottleneck_forward(x, w_t, b, gamma, beta, running_mean, running_var)
    out_bf16 = jax.block_until_ready(out_bf16)
    assert out_bf16.shape == (B, D) and out_bf16.dtype == jnp.bfloat16
    assert jnp.allclose(out_bf16.astype(jnp.float32), ref, atol=5e-2, rtol=5e-2), \
        "bf16 mismatch vs reference"

    # 3) batch-tiled grid path with a partial (masked) edge block: B=200, tile_b=64
    #    -> 4 grid steps, last block has only 8 valid rows (no wrapper pad/slice).
    B2 = 200
    x2 = jax.random.normal(kx2, (B2, F), dtype=jnp.float32)
    ref2 = reference_forward(x2, w_t, b, gamma, beta, running_mean, running_var)
    out2 = feat_bottleneck_forward(x2, w_t, b, gamma, beta, running_mean, running_var,
                                   compute_dtype=jnp.float32, tile_b=64)
    out2 = jax.block_until_ready(out2)
    assert out2.shape == (B2, D) and out2.dtype == jnp.float32
    assert jnp.allclose(out2, ref2, atol=1e-4, rtol=1e-4), "grid-path mismatch vs reference"

    print("KERNEL_OK")
</pallas_src>

<mosaic_0001>
module attributes {stable_mosaic.version = 11 : i64} {
  func.func @_feat_bottleneck_kernel(%arg0: memref<40x64xf32, #tpu.memory_space<vmem>>, %arg1: memref<64x128xf32, #tpu.memory_space<vmem>>, %arg2: memref<1x128xf32, #tpu.memory_space<vmem>>, %arg3: memref<40x128xf32, #tpu.memory_space<vmem>>) attributes {dimension_semantics = [], scalar_prefetch = 0 : i64, scratch_operands = 0 : i64, tpu.core_type = #tpu.core_type<tc>} {
    %c0 = arith.constant 0 : index
    %c0_0 = arith.constant 0 : index
    %0 = vector.load %arg0[%c0, %c0_0] : memref<40x64xf32, #tpu.memory_space<vmem>>, vector<40x64xf32>
    %c0_1 = arith.constant 0 : index
    %c0_2 = arith.constant 0 : index
    %1 = vector.load %arg1[%c0_1, %c0_2] : memref<64x128xf32, #tpu.memory_space<vmem>>, vector<64x128xf32>
    %cst = arith.constant dense<0.000000e+00> : vector<40x128xf32>
    %2 = tpu.matmul %0, %1, %cst {dimension_numbers = #tpu.dot_dimension_numbers<[1], [0], [0], [1], [0, 0, 1, 1], [], []>} : vector<40x64xf32>, vector<64x128xf32>, vector<40x128xf32> -> vector<40x128xf32>
    %c0_3 = arith.constant 0 : index
    %c0_4 = arith.constant 0 : index
    %3 = vector.load %arg2[%c0_3, %c0_4] : memref<1x128xf32, #tpu.memory_space<vmem>>, vector<1x128xf32>
    %4 = vector.broadcast %3 : vector<1x128xf32> to vector<40x128xf32>
    %5 = arith.addf %2, %4 : vector<40x128xf32>
    %cst_5 = arith.constant 0.000000e+00 : f32
    %6 = vector.broadcast %cst_5 : f32 to vector<40x128xf32>
    %7 = arith.maximumf %5, %6 : vector<40x128xf32>
    %c0_6 = arith.constant 0 : index
    %c0_7 = arith.constant 0 : index
    %8 = vector.load %arg3[%c0_6, %c0_7] : memref<40x128xf32, #tpu.memory_space<vmem>>, vector<40x128xf32>
    tpu.vector_store %arg3[%c0_6, %c0_7], %7 {strides = array<i32>} : memref<40x128xf32, #tpu.memory_space<vmem>>, vector<40x128xf32>,
    return
  }
}

</mosaic_0001>

<llo_original>
// kernel: tpu_custom_call.1
$region0: #{tpu_custom_call.1}
  #allocation0 [shape = 'u32[]', space=smem, size = 0x4, offset = 0x4, fixed_abs, tag = 'smem constant byte address 0x4 - core index']
  #allocation1 [shape = 'u32[72,128]{1,0:T(1,128)}', space=vmem, size = 0x9000, scoped, tag = 'internal scratch']
  %s0 = inlined_call_operand.hbm [shape: f32[40,64], index: 0, kind: input, shape index: {}]
  %s1 = inlined_call_operand.hbm [shape: f32[64,128], index: 1, kind: input, shape index: {}]
  %s2 = inlined_call_operand.vmem [shape: f32[1,128], index: 2, kind: input, shape index: {}]
  %s3 = inlined_call_operand.hbm [shape: f32[40,128], index: 3, kind: output, shape index: {}]
  %s4 = sld [smem:[#allocation0]]
  $region30: #{tpu_custom_call.1} parent=0
    _
  %s6 = ssub.s32 1, %s4
  %s7 = scalar_select 0, %s6, %s4
  $region1: #{tpu_custom_call.1} parent=0
    #allocation2 [shape = 'u8[20480]{0}', space=vmem, size = 0x5000, scoped, tag = 'input window, operand 0, single buffered']
    #allocation3 [shape = 's32[1]{0}', space=sflag, size = 0x4, scoped, tag = 'scoped memory for tpu_custom_call.1']
    #allocation4 [shape = 's32[1]{0}', space=sflag, size = 0x4, scoped, tag = 'scoped memory for tpu_custom_call.1']
    #allocation5 [shape = 'u8[32768]{0}', space=vmem, size = 0x8000, scoped, tag = 'input window, operand 1, single buffered']
    #allocation6 [shape = 's32[1]{0}', space=sflag, size = 0x4, scoped, tag = 'scoped memory for tpu_custom_call.1']
    #allocation7 [shape = 'u8[20480]{0}', space=vmem, size = 0x5000, scoped, tag = 'output window, operand 0, single buffered']
    %8 = vsyncpa [#allocation3], 0
    %9 = vsyncpa [#allocation6], 0
    %10 = vsyncpa [#allocation4], 0
    // Predicated region
    $region2: #{tpu_custom_call.1} parent=1 // pred_check
      _
    $region3: #{tpu_custom_call.1} parent=1 // pred_check_branch
      %12 = sbr.rel (0) target = $region5
    $region4: #{tpu_custom_call.1} parent=1 // pred_region
      %14 = vsyncadd [#allocation3], 0
      %s15 = sshll.u32 %s0, 4
      %s16 = int_to_ptr.hbm [resolvable:$true] %s15
      %s17 = sshll.u32 [#allocation2], 4
      %s18 = int_to_ptr.vmem [resolvable:$true] %s17
      %23 = dma.hbm_to_vmem [thread:$0]  %s16, 640, %s18, [#allocation3], 128, 128, 8
    $region5: #{tpu_custom_call.1} parent=1 // pred_fallthru
      _
    // Predicated region
    $region6: #{tpu_custom_call.1} parent=1 // pred_check
      _
    $region7: #{tpu_custom_call.1} parent=1 // pred_check_branch
      %25 = sbr.rel (0) target = $region9
    $region8: #{tpu_custom_call.1} parent=1 // pred_region
      %27 = vsyncadd [#allocation6], 0
      %s28 = sshll.u32 %s1, 4
      %s29 = int_to_ptr.hbm [resolvable:$true] %s28
      %s30 = sshll.u32 [#allocation5], 4
      %s31 = int_to_ptr.vmem [resolvable:$true] %s30
      %36 = dma.hbm_to_vmem [thread:$0]  %s29, 1024, %s31, [#allocation6], 128, 128, 8
    $region9: #{tpu_custom_call.1} parent=1 // pred_fallthru
      _
    // Predicated region
    $region10: #{tpu_custom_call.1} parent=1 // pred_check
      _
    $region11: #{tpu_custom_call.1} parent=1 // pred_check_branch
      %38 = sbr.rel (0) target = $region13
    $region12: #{tpu_custom_call.1} parent=1 // pred_region
      _
    $region13: #{tpu_custom_call.1} parent=1 // pred_fallthru
      _
    // Predicated region
    $region14: #{tpu_custom_call.1} parent=1 // pred_check
      _
    $region15: #{tpu_custom_call.1} parent=1 // pred_check_branch
      %40 = sbr.rel (0) target = $region17
    $region16: #{tpu_custom_call.1} parent=1 // pred_region
      %42 = dma.done [#allocation3], 640
    $region17: #{tpu_custom_call.1} parent=1 // pred_fallthru
      _
    // Predicated region
    $region18: #{tpu_custom_call.1} parent=1 // pred_check
      _
    $region19: #{tpu_custom_call.1} parent=1 // pred_check_branch
      %44 = sbr.rel (0) target = $region21
    $region20: #{tpu_custom_call.1} parent=1 // pred_region
      %46 = dma.done [#allocation6], 1024
    $region21: #{tpu_custom_call.1} parent=1 // pred_fallthru
      _
    %v47 = vld [vmem:[#allocation2] sm:$0xff]
    %v48 = vld [vmem:[#allocation2 + $0x8] sm:$0xff]
    %v49 = vld [vmem:[#allocation2 + $0x10] sm:$0xff]
    %v50 = vld [vmem:[#allocation2 + $0x18] sm:$0xff]
    %v51 = vld [vmem:[#allocation2 + $0x20] sm:$0xff]
    %v52 = vld [vmem:[#allocation5] sm:$0xff]
    %v53 = vld [vmem:[#allocation5 + $0x8] sm:$0xff]
    %v54 = vld [vmem:[#allocation5 + $0x10] sm:$0xff]
    %v55 = vld [vmem:[#allocation5 + $0x18] sm:$0xff]
    %v56 = vld [vmem:[#allocation5 + $0x20] sm:$0xff]
    %v57 = vld [vmem:[#allocation5 + $0x28] sm:$0xff]
    %v58 = vld [vmem:[#allocation5 + $0x30] sm:$0xff]
    %v59 = vld [vmem:[#allocation5 + $0x38] sm:$0xff]
    %v60 = vld [vmem:[%s2] sm:$0x1]
    %v62 = vperm.slane %v60, 0
    %vm64 = vcmask 523264
    %v66 = vsel %vm64, %v47, 0
    %v69 = vsel %vm64, %v48, 0
    %v72 = vsel %vm64, %v49, 0
    %v75 = vsel %vm64, %v50, 0
    %v78 = vsel %vm64, %v51, 0
    %80 = vmatpush.msra.mxu0 0.0
    %81 = vmatpush.msra.mxu0 0.0
    %82 = vmatpush.msra.mxu0 0.0
    %83 = vmatpush.msra.mxu0 0.0
    %84 = vmatpush.msra.mxu0 0.0
    %85 = vmatpush.msra.mxu0 0.0
    %86 = vmatpush.msra.mxu0 0.0
    %87 = vmatpush.msra.mxu0 0.0
    %88 = vmatpush.msra.mxu0 %v59
    %89 = vmatpush.msra.mxu0 %v58
    %90 = vmatpush.msra.mxu0 %v57
    %91 = vmatpush.msra.mxu0 %v56
    %92 = vmatpush.msra.mxu0 %v55
    %93 = vmatpush.msra.mxu0 %v54
    %94 = vmatpush.msra.mxu0 %v53
    %95 = vmatpush.msra.mxu0 %v52
    %96 = vmatmul.f32.gmra.mxu0 %v66
    %v97 = vpop.f32.mrf.mxu0
    %v98 = vadd.f32 %v62, %v97
    %99 = vmatmul.f32.gmra.mxu0 %v69
    %v100 = vpop.f32.mrf.mxu0
    %v101 = vadd.f32 %v62, %v100
    %102 = vmatmul.f32.gmra.mxu0 %v72
    %v103 = vpop.f32.mrf.mxu0
    %v104 = vadd.f32 %v62, %v103
    %105 = vmatmul.f32.gmra.mxu0 %v75
    %v106 = vpop.f32.mrf.mxu0
    %v107 = vadd.f32 %v62, %v106
    %108 = vmatmul.f32.gmra.mxu0 %v78
    %v109 = vpop.f32.mrf.mxu0
    %v110 = vadd.f32 %v62, %v109
    %111 = vdwg.mxu0
    %v112 = vmax.f32 %v98, 0.0
    %v113 = vmax.f32 %v101, 0.0
    %v114 = vmax.f32 %v104, 0.0
    %v115 = vmax.f32 %v107, 0.0
    %v116 = vmax.f32 %v110, 0.0
    %117 = vst [vmem:[#allocation7] sm:$0xff] %v112
    %118 = vst [vmem:[#allocation7 + $0x8] sm:$0xff] %v113
    %119 = vst [vmem:[#allocation7 + $0x10] sm:$0xff] %v114
    %120 = vst [vmem:[#allocation7 + $0x18] sm:$0xff] %v115
    %121 = vst [vmem:[#allocation7 + $0x20] sm:$0xff] %v116
    // Predicated region
    $region22: #{tpu_custom_call.1} parent=1 // pred_check
      _
    $region23: #{tpu_custom_call.1} parent=1 // pred_check_branch
      %123 = sbr.rel (0) target = $region25
    $region24: #{tpu_custom_call.1} parent=1 // pred_region
      %125 = vsyncadd [#allocation4], 0
      %s126 = sshll.u32 [#allocation7], 4
      %s127 = int_to_ptr.vmem [resolvable:$true] %s126
      %s128 = sshll.u32 %s3, 4
      %s129 = int_to_ptr.hbm [resolvable:$true] %s128
      %134 = dma.vmem_to_hbm [thread:$0]  %s127, 640, %s129, [#allocation4], 128, 128, 8
    $region25: #{tpu_custom_call.1} parent=1 // pred_fallthru
      _
    // Predicated region
    $region26: #{tpu_custom_call.1} parent=1 // pred_check
      _
    $region27: #{tpu_custom_call.1} parent=1 // pred_check_branch
      %136 = sbr.rel (0) target = $region29
    $region28: #{tpu_custom_call.1} parent=1 // pred_region
      %138 = dma.done [#allocation4], 640
    $region29: #{tpu_custom_call.1} parent=1 // pred_fallthru
      _
    %139 = vsyncpa [#allocation3], 1
    %140 = vsyncpa [#allocation6], 1
    %141 = vsyncpa [#allocation4], 1

</llo_original>
